<compile_context>
chip_gen: v6e
topology: v6e:2x2x1
jax: 0.10.0
libtpu: 0.0.40
codegen_flags: <defaults>
</compile_context>

<pallas_src>
import jax
import jax.numpy as jnp
from jax import lax
from jax.experimental import pallas as pl
from jax.experimental.pallas import tpu as pltpu


def _attention_weights_kernel(x_ref, w_ref, o_ref):
    """One (batch, N-tile) grid step.

    x_ref: (1, TILE_N, C)        input tile, native dtype
    w_ref: (1, C)                Linear weight row (same dtype as x)
    o_ref: (1, N_TILES, TILE_N)  f32, resident across the N-tile grid axis
    """
    j = pl.program_id(1)

    # Lane-dense scores: contract C between (1, C) and (TILE_N, C) -> (1, TILE_N).
    s = lax.dot_general(
        w_ref[...], x_ref[0],
        dimension_numbers=(((1,), (1,)), ((), ())),
        preferred_element_type=jnp.float32,
    )
    # Stash this tile's raw logits into its row of the resident output block.
    o_ref[0, pl.ds(j, 1), :] = s

    # On the last N-tile, the full row of logits is resident: do the softmax
    # over all of N (i.e. over every element of the (N_TILES, TILE_N) block).
    @pl.when(j == pl.num_programs(1) - 1)
    def _finalize():
        scores = o_ref[0]                                   # (N_TILES, TILE_N) f32
        m = jnp.max(scores, keepdims=True)                  # (1, 1)
        e = jnp.exp(scores - m)
        denom = jnp.sum(e, keepdims=True)                   # (1, 1)
        o_ref[0] = e * pl.reciprocal(denom, approx=False)


def _pick_tile_n(n, c, itemsize):
    """Whole N when small; otherwise a 128-multiple divisor of N targeting an
    x tile of a few MiB (keeps DMA pipelined, fits v5e/v7x scoped VMEM)."""
    if n <= 512:
        return n
    target = max(512, min(n, (4 * 1024 * 1024) // max(1, c * itemsize)))
    for t in (4096, 2048, 1024, 512):
        if t <= target and n % t == 0:
            return t
    for t in (256, 128):
        if n % t == 0:
            return t
    return n  # fallback: single tile over N


def attention_weights(x, weight, bias=None):
    """x: (B, N, C) any float dtype; weight: (1, C) (nn.Linear(in,1) layout);
    bias: (1,) accepted for API parity but unused (softmax over N is
    shift-invariant).  Returns (B, N, 1) float32 attention weights."""
    del bias  # mathematical no-op after softmax over dim=1
    B, N, C = x.shape
    w = jnp.asarray(weight).reshape(1, C).astype(x.dtype)

    itemsize = jnp.dtype(x.dtype).itemsize
    tile_n = _pick_tile_n(N, C, itemsize)
    n_tiles = N // tile_n
    assert n_tiles * tile_n == N

    cost = pl.CostEstimate(
        flops=2 * B * N * C + 5 * B * N,
        transcendentals=B * N,
        bytes_accessed=B * N * C * itemsize + C * itemsize + B * N * 4,
    )

    out = pl.pallas_call(
        _attention_weights_kernel,
        out_shape=jax.ShapeDtypeStruct((B, n_tiles, tile_n), jnp.float32),
        grid_spec=pltpu.PrefetchScalarGridSpec(
            num_scalar_prefetch=0,
            grid=(B, n_tiles),
            in_specs=[
                pl.BlockSpec((1, tile_n, C), lambda b, j: (b, j, 0)),
                pl.BlockSpec((1, C), lambda b, j: (0, 0)),
            ],
            out_specs=pl.BlockSpec((1, n_tiles, tile_n), lambda b, j: (b, 0, 0)),
        ),
        compiler_params=pltpu.CompilerParams(
            dimension_semantics=("parallel", "arbitrary"),
        ),
        cost_estimate=cost,
    )(x, w)

    # (B, n_tiles, tile_n) row-major == (B, N); present PyTorch's (B, N, 1).
    return out.reshape(B, N, 1)


if __name__ == "__main__":
    key = jax.random.PRNGKey(0)
    kx, kw, kb = jax.random.split(key, 3)

    # Small shapes consistent with the module: batch=2, points=8, in_features=32.
    B, N, C = 2, 8, 32
    x = jax.random.normal(kx, (B, N, C), dtype=jnp.float32)
    bound = 1.0 / (C ** 0.5)
    weight = jax.random.uniform(kw, (1, C), minval=-bound, maxval=bound,
                                dtype=jnp.float32)
    bias = jax.random.uniform(kb, (1,), minval=-bound, maxval=bound,
                              dtype=jnp.float32)

    out = jax.block_until_ready(attention_weights(x, weight, bias))
    ref = jax.nn.softmax(jnp.einsum("bnc,c->bn", x, weight[0]) + bias[0],
                         axis=1)[..., None]
    assert out.shape == (B, N, 1)
    assert jnp.allclose(out, ref, atol=1e-4, rtol=1e-4)

    # Sanity-check the multi-tile (N-tiled) path as well.
    B2, N2, C2 = 2, 1536, 128           # -> TILE_N=512, 3 tiles per batch
    x2 = jax.random.normal(kx, (B2, N2, C2), dtype=jnp.float32)
    w2 = jax.random.uniform(kw, (1, C2), minval=-0.1, maxval=0.1,
                            dtype=jnp.float32)
    out2 = jax.block_until_ready(attention_weights(x2, w2))
    ref2 = jax.nn.softmax(jnp.einsum("bnc,c->bn", x2, w2[0]), axis=1)[..., None]
    assert out2.shape == (B2, N2, 1)
    assert jnp.allclose(out2, ref2, atol=1e-4, rtol=1e-4)

    print("KERNEL_OK")
</pallas_src>

<mosaic_0001>
module attributes {stable_mosaic.version = 11 : i64} {
  func.func @_attention_weights_kernel(%arg0: i32, %arg1: i32, %arg2: memref<1x8x32xf32, #tpu.memory_space<vmem>>, %arg3: memref<1x32xf32, #tpu.memory_space<vmem>>, %arg4: memref<1x1x8xf32, #tpu.memory_space<vmem>>) attributes {dimension_semantics = [#tpu.dimension_semantics<parallel>, #tpu.dimension_semantics<arbitrary>], iteration_bounds = array<i64: 2, 1>, scalar_prefetch = 0 : i64, scratch_operands = 0 : i64, tpu.core_type = #tpu.core_type<tc>, window_params = [{transform_indices = @transform_0, window_bounds = array<i64: 1, 8, 32>}, {pipeline_mode = #tpu.pipeline_mode<synchronous>, transform_indices = @transform_1, window_bounds = array<i64: 1, 32>}, {transform_indices = @transform_2, window_bounds = array<i64: 1, 1, 8>}]} {
    %c0 = arith.constant 0 : index
    %c0_0 = arith.constant 0 : index
    %0 = vector.load %arg3[%c0, %c0_0] : memref<1x32xf32, #tpu.memory_space<vmem>>, vector<1x32xf32>
    %c0_1 = arith.constant 0 : index
    %c0_2 = arith.constant 0 : index
    %c0_3 = arith.constant 0 : index
    %1 = vector.load %arg2[%c0_1, %c0_2, %c0_3] : memref<1x8x32xf32, #tpu.memory_space<vmem>>, vector<1x8x32xf32>
    %2 = vector.shape_cast %1 : vector<1x8x32xf32> to vector<8x32xf32>
    %cst = arith.constant dense<0.000000e+00> : vector<1x8xf32>
    %3 = tpu.matmul %0, %2, %cst {dimension_numbers = #tpu.dot_dimension_numbers<[1], [1], [0], [0], [0, 0, 1, 0], [], []>} : vector<1x32xf32>, vector<8x32xf32>, vector<1x8xf32> -> vector<1x8xf32>
    %c0_4 = arith.constant 0 : index
    %4 = arith.index_cast %arg1 : i32 to index
    %c0_5 = arith.constant 0 : index
    %5 = vector.load %arg4[%c0_4, %4, %c0_5] : memref<1x1x8xf32, #tpu.memory_space<vmem>>, vector<1x1x8xf32>
    %6 = vector.shape_cast %5 : vector<1x1x8xf32> to vector<1x8xf32>
    %7 = vector.shape_cast %3 : vector<1x8xf32> to vector<1x1x8xf32>
    tpu.vector_store %arg4[%c0_4, %4, %c0_5], %7 {strides = array<i32>} : memref<1x1x8xf32, #tpu.memory_space<vmem>>, vector<1x1x8xf32>,
    %c0_i32 = arith.constant 0 : i32
    %8 = arith.cmpi eq, %arg1, %c0_i32 : i32
    %9 = arith.extui %8 : i1 to i32
    %c0_i32_6 = arith.constant 0 : i32
    %10 = arith.cmpi ne, %9, %c0_i32_6 : i32
    scf.if %10 {
      %c0_7 = arith.constant 0 : index
      %c0_8 = arith.constant 0 : index
      %c0_9 = arith.constant 0 : index
      %11 = vector.load %arg4[%c0_7, %c0_8, %c0_9] : memref<1x1x8xf32, #tpu.memory_space<vmem>>, vector<1x1x8xf32>
      %12 = vector.shape_cast %11 : vector<1x1x8xf32> to vector<1x8xf32>
      %13 = vector.shape_cast %12 : vector<1x8xf32> to vector<1x1x8xf32>
      %cst_10 = arith.constant dense<0xFF800000> : vector<1xf32>
      %14 = vector.multi_reduction <maximumf>, %13, %cst_10 [1, 2] : vector<1x1x8xf32> to vector<1xf32>
      %15 = vector.shape_cast %14 : vector<1xf32> to vector<1x1x1xf32>
      %16 = vector.extract %15[0, 0, 0] : f32 from vector<1x1x1xf32>
      %17 = vector.broadcast %16 : f32 to vector<1x1xf32>
      %18 = vector.broadcast %17 : vector<1x1xf32> to vector<1x8xf32>
      %19 = arith.subf %12, %18 : vector<1x8xf32>
      %20 = math.exp %19 : vector<1x8xf32>
      %21 = vector.shape_cast %20 : vector<1x8xf32> to vector<1x1x8xf32>
      %cst_11 = arith.constant dense<0.000000e+00> : vector<1xf32>
      %22 = vector.multi_reduction <add>, %21, %cst_11 [1, 2] : vector<1x1x8xf32> to vector<1xf32>
      %23 = vector.shape_cast %22 : vector<1xf32> to vector<1x1x1xf32>
      %24 = vector.extract %23[0, 0, 0] : f32 from vector<1x1x1xf32>
      %25 = vector.broadcast %24 : f32 to vector<1x1xf32>
      %26 = tpu.reciprocal %25 : vector<1x1xf32> -> vector<1x1xf32>
      %27 = vector.broadcast %26 : vector<1x1xf32> to vector<1x8xf32>
      %28 = arith.mulf %20, %27 : vector<1x8xf32>
      %c0_12 = arith.constant 0 : index
      %c0_13 = arith.constant 0 : index
      %c0_14 = arith.constant 0 : index
      %29 = vector.load %arg4[%c0_12, %c0_13, %c0_14] : memref<1x1x8xf32, #tpu.memory_space<vmem>>, vector<1x1x8xf32>
      %30 = vector.shape_cast %29 : vector<1x1x8xf32> to vector<1x8xf32>
      %31 = vector.shape_cast %28 : vector<1x8xf32> to vector<1x1x8xf32>
      tpu.vector_store %arg4[%c0_12, %c0_13, %c0_14], %31 {strides = array<i32>} : memref<1x1x8xf32, #tpu.memory_space<vmem>>, vector<1x1x8xf32>,
    } else {
    }
    return
  }
  func.func @transform_0(%arg0: i32, %arg1: i32) -> (i32, i32, i32) {
    %c0_i32 = arith.constant 0 : i32
    %c0_i32_0 = arith.constant 0 : i32
    return %arg0, %arg1, %c0_i32 : i32, i32, i32
  }
  func.func @transform_1(%arg0: i32, %arg1: i32) -> (i32, i32) {
    %c0_i32 = arith.constant 0 : i32
    %c0_i32_0 = arith.constant 0 : i32
    %c0_i32_1 = arith.constant 0 : i32
    return %c0_i32, %c0_i32_0 : i32, i32
  }
  func.func @transform_2(%arg0: i32, %arg1: i32) -> (i32, i32, i32) {
    %c0_i32 = arith.constant 0 : i32
    %c0_i32_0 = arith.constant 0 : i32
    %c0_i32_1 = arith.constant 0 : i32
    return %arg0, %c0_i32, %c0_i32_0 : i32, i32, i32
  }
}

</mosaic_0001>

<llo_original>
// kernel: tpu_custom_call.1
$region0: #{tpu_custom_call.1}
  #allocation0 [shape = 'u32[]', space=smem, size = 0x4, offset = 0x4, fixed_abs, tag = 'smem constant byte address 0x4 - core index']
  #allocation1 [shape = 'u32[144,128]{1,0:T(1,128)}', space=vmem, size = 0x12000, scoped, tag = 'internal scratch']
  %s0 = inlined_call_operand.hbm [shape: f32[2,8,32], index: 0, kind: input, shape index: {}]
  %s1 = inlined_call_operand.vmem [shape: f32[1,32], index: 1, kind: input, shape index: {}]
  %s2 = inlined_call_operand.hbm [shape: f32[2,1,8], index: 2, kind: output, shape index: {}]
  %s3 = sld [smem:[#allocation0]]
  $region49: #{tpu_custom_call.1} parent=0
    _
  %s5 = ssub.s32 1, %s3
  %s6 = scalar_select 0, %s5, %s3
  $region1: #{tpu_custom_call.1} parent=0
    #allocation2 [shape = 'u8[8192]{0}', space=vmem, size = 0x2000, scoped, tag = 'input window, operand 0']
    #allocation3 [shape = 's32[2]{0}', space=sflag, size = 0x8, scoped, tag = 'scoped memory for tpu_custom_call.1']
    #allocation4 [shape = 's32[2]{0}', space=sflag, size = 0x8, scoped, tag = 'scoped memory for tpu_custom_call.1']
    #allocation5 [shape = 'u8[1024]{0}', space=vmem, size = 0x400, scoped, tag = 'output window, operand 0']
    %7 = vsyncpa [#allocation3], 0
    %s8 = scalar_lea.sflag [#allocation3], 1
    %9 = vsyncpa %s8, 0
    %10 = vsyncpa [#allocation4], 0
    %s11 = scalar_lea.sflag [#allocation4], 1
    %12 = vsyncpa %s11, 0
    loop: start=0, step=1, limit=4
    $region2: #{tpu_custom_call.1} parent=1 // loop_pre_header
      _
    $region3: #{tpu_custom_call.1} parent=1 // loop_header
      %s14 = sphi 0, %s18
      %p15 = scmp.ge.s32.totalorder %s14, 4
      %s21 = sphi 0, %s33
      %s22 = sphi 0, %s29
      %s23 = sphi 0, %s21
      %s24 = sphi 0, %s22
      %s25 = sphi 0, %s23
      %s26 = sphi 0, %s24
      %s38 = sphi 0, %s40
      %s41 = sphi 0, %s38
      %s42 = sphi 0, %s41
      %s58 = sphi 0, %s42
      %s62 = sphi 0, %s62
      %s64 = sphi 0, %s62
      %s65 = sphi 0, %s64
      %s79 = sphi 0, %s65
      %s85 = sphi 0, %s87
      %s88 = sphi 0, %s85
      %s89 = sphi 0, %s88
      %s105 = sphi 0, %s89
    $region4: #{tpu_custom_call.1} parent=1 // loop_header_branch
      %17 = sbr.rel (%p15) target = $region8
    $region5: #{tpu_custom_call.1} parent=1 // loop_body
      %s19 = ssub.s32 %s14, 1
      %s20 = ssub.s32 %s14, 2
      %s27 = sadd.s32 1, %s22
      %p28 = scmp.ge.s32.totalorder %s27, 1
      %s29 = scalar_select %p28, 0, %s27
      %s30 = sadd.s32 1, %s21
      %s31 = scalar_select %p28, %s30, %s21
      %p32 = scmp.ge.s32.totalorder %s31, 2
      %s33 = scalar_select %p32, 0, %s31
      %s34 = ssub.s32 %s21, %s33
      %s35 = ssub.s32 %s22, %s29
      %s36 = sor.u32 %s34, %s35
      %p37 = scmp.eq.s32.totalorder %s36, 0
      %s39 = sadd.s32 %s38, 1
      %s40 = scalar_select %p37, %s38, %s39
      %p43 = pneg %p37
      %p44 = scmp.eq.s32.totalorder %s14, 1
      %p45 = por %p43, %p44
      %p46 = scmp.ne.s32.totalorder %s38, %s41
      %p47 = scmp.eq.s32.totalorder %s14, 0
      %p48 = por %p46, %p47
      %p49 = scmp.ne.s32.totalorder %s38, %s41
      %p50 = scmp.eq.s32.totalorder %s19, 1
      %p51 = por %p49, %p50
      %p52 = scmp.ne.s32.totalorder %s41, %s42
      %p53 = scmp.eq.s32.totalorder %s19, 0
      %p54 = por %p52, %p53
      %p55 = scmp.ne.s32.totalorder %s41, %s42
      %p56 = scmp.eq.s32.totalorder %s20, 1
      %p57 = por %p55, %p56
      %p59 = scmp.ne.s32.totalorder %s42, %s58
      %p60 = scmp.eq.s32.totalorder %s20, 0
      %p61 = por %p59, %p60
      %s63 = sadd.s32 %s62, 1
      %p66 = scmp.eq.s32.totalorder %s14, 1
      %p67 = scmp.ne.s32.totalorder %s62, %s64
      %p68 = scmp.eq.s32.totalorder %s14, 0
      %p69 = por %p67, %p68
      %p70 = scmp.ne.s32.totalorder %s62, %s64
      %p71 = scmp.eq.s32.totalorder %s19, 1
      %p72 = por %p70, %p71
      %p73 = scmp.ne.s32.totalorder %s64, %s65
      %p74 = scmp.eq.s32.totalorder %s19, 0
      %p75 = por %p73, %p74
      %p76 = scmp.ne.s32.totalorder %s64, %s65
      %p77 = scmp.eq.s32.totalorder %s20, 1
      %p78 = por %p76, %p77
      %p80 = scmp.ne.s32.totalorder %s65, %s79
      %p81 = scmp.eq.s32.totalorder %s20, 0
      %p82 = por %p80, %p81
      %s83 = ssub.s32 %s21, %s33
      %p84 = scmp.eq.s32.totalorder %s83, 0
      %s86 = sadd.s32 %s85, 1
      %s87 = scalar_select %p84, %s85, %s86
      %p90 = pneg %p84
      %p91 = scmp.eq.s32.totalorder %s14, 1
      %p92 = por %p90, %p91
      %p93 = scmp.ne.s32.totalorder %s85, %s88
      %p94 = scmp.eq.s32.totalorder %s14, 0
      %p95 = por %p93, %p94
      %p96 = scmp.ne.s32.totalorder %s85, %s88
      %p97 = scmp.eq.s32.totalorder %s19, 1
      %p98 = por %p96, %p97
      %p99 = scmp.ne.s32.totalorder %s88, %s89
      %p100 = scmp.eq.s32.totalorder %s19, 0
      %p101 = por %p99, %p100
      %p102 = scmp.ne.s32.totalorder %s88, %s89
      %p103 = scmp.eq.s32.totalorder %s20, 1
      %p104 = por %p102, %p103
      %p106 = scmp.ne.s32.totalorder %s89, %s105
      %p107 = scmp.eq.s32.totalorder %s20, 0
      %p108 = por %p106, %p107
      %p109 = scmp.le.s32.totalorder 1, %s14
      %p110 = scmp.lt.s32.totalorder %s14, 3
      %p111 = pnand %p109, %p110
      %p112 = pneg %p111
      // Predicated region
      $region9: #{tpu_custom_call.1} parent=5 // pred_check
        _
      $region10: #{tpu_custom_call.1} parent=5 // pred_check_branch
        %114 = sbr.rel (%p111) target = $region12
      $region11: #{tpu_custom_call.1} parent=5 // pred_region
        %s115 = ssub.s32 %s14, 1
        // Predicated region
        $region13: #{tpu_custom_call.1} parent=11 // pred_check
          %p116 = pneg %p75
        $region14: #{tpu_custom_call.1} parent=11 // pred_check_branch
          %118 = sbr.rel (%p116) target = $region16
        $region15: #{tpu_custom_call.1} parent=11 // pred_region
          _
        $region16: #{tpu_custom_call.1} parent=11 // pred_fallthru
          _
      $region12: #{tpu_custom_call.1} parent=5 // pred_fallthru
        _
      %p119 = scmp.lt.s32.totalorder %s14, 2
      // Predicated region
      $region17: #{tpu_custom_call.1} parent=5 // pred_check
        %p120 = pneg %p119
      $region18: #{tpu_custom_call.1} parent=5 // pred_check_branch
        %122 = sbr.rel (%p120) target = $region20
      $region19: #{tpu_custom_call.1} parent=5 // pred_region
        // Predicated region
        $region21: #{tpu_custom_call.1} parent=19 // pred_check
          %p123 = pneg %p48
        $region22: #{tpu_custom_call.1} parent=19 // pred_check_branch
          %125 = sbr.rel (%p123) target = $region24
        $region23: #{tpu_custom_call.1} parent=19 // pred_region
          %s126 = sand.u32 %s38, 1
          %s127 = scalar_lea.sflag [#allocation3], %s126
          %s128 = sand.u32 %s38, 1
          %s129 = smul.addr %s128, 8
          %s130 = scalar_lea.vmem [#allocation2], %s129
          %s132 = ssub.s32 128, 128
          %133 = vsyncadd %s127, %s132
          %s134 = sadd.s32 %s22, %s21
          %s135 = smul.addr %s134, 128
          %s136 = scalar_lea.hbm %s0, %s135
          %s138 = sshll.u32 %s130, 4
          %s139 = int_to_ptr.vmem [resolvable:$true] %s138
          %141 = dma.hbm_to_vmem [thread:$0]  %s136, 128, %s139, %s127
        $region24: #{tpu_custom_call.1} parent=19 // pred_fallthru
          _
      $region20: #{tpu_custom_call.1} parent=5 // pred_fallthru
        _
      %p142 = scmp.le.s32.totalorder 1, %s14
      %p143 = scmp.lt.s32.totalorder %s14, 3
      %p144 = pnand %p142, %p143
      %p145 = pneg %p144
      // Predicated region
      $region25: #{tpu_custom_call.1} parent=5 // pred_check
        _
      $region26: #{tpu_custom_call.1} parent=5 // pred_check_branch
        %147 = sbr.rel (%p144) target = $region28
      $region27: #{tpu_custom_call.1} parent=5 // pred_region
        %s148 = ssub.s32 %s14, 1
        %s149 = sand.u32 %s41, 1
        %s150 = scalar_lea.sflag [#allocation3], %s149
        %s151 = sand.u32 %s41, 1
        %s152 = smul.addr %s151, 8
        %s153 = scalar_lea.vmem [#allocation2], %s152
        // Predicated region
        $region29: #{tpu_custom_call.1} parent=27 // pred_check
          %p154 = pneg %p54
        $region30: #{tpu_custom_call.1} parent=27 // pred_check_branch
          %156 = sbr.rel (%p154) target = $region32
        $region31: #{tpu_custom_call.1} parent=27 // pred_region
          %157 = dma.done %s150, 128
        $region32: #{tpu_custom_call.1} parent=27 // pred_fallthru
          _
        %s158 = sand.u32 %s41, 1
        %s159 = scalar_lea.sflag [#allocation3], %s158
        %s160 = sand.u32 %s41, 1
        %s161 = smul.addr %s160, 8
        %s162 = scalar_lea.vmem [#allocation2], %s161
        %p163 = pneg %p54
        %p164 = pneg %p51
        %p165 = pneg %p75
        %p166 = pneg %p72
        %p167 = pneg %p101
        %p168 = pneg %p98
        %s169 = sand.u32 %s88, 1
        %s170 = scalar_lea.sflag [#allocation4], %s169
        %s171 = sand.u32 %s88, 1
        %s172 = scalar_lea.vmem [#allocation5], %s171
        %v173 = vld [vmem:[%s1] sm:$0x1]
        %v174 = vld [vmem:[%s153] sm:$0xff]
        %vm175 = vcmask 261120
        %v177 = vsel %vm175, %v173, 0
        %v180 = vsel %vm175, %v174, 0
        %182 = vmatprep.subr.mxu0 0.0
        %183 = vmatpush1.xpose.msra.mxu0 0.0
        %184 = vmatprep.subr.mxu0 0.0
        %185 = vmatpush1.xpose.msra.mxu0 0.0
        %186 = vmatprep.subr.mxu0 0.0
        %187 = vmatpush1.xpose.msra.mxu0 0.0
        %188 = vmatprep.subr.mxu0 0.0
        %189 = vmatpush1.xpose.msra.mxu0 0.0
        %190 = vmatprep.subr.mxu0 0.0
        %191 = vmatpush1.xpose.msra.mxu0 0.0
        %192 = vmatprep.subr.mxu0 0.0
        %193 = vmatpush1.xpose.msra.mxu0 0.0
        %194 = vmatprep.subr.mxu0 0.0
        %195 = vmatpush1.xpose.msra.mxu0 0.0
        %196 = vmatprep.subr.mxu0 0.0
        %197 = vmatpush1.xpose.msra.mxu0 0.0
        %198 = vmatprep.subr.mxu0 0.0
        %199 = vmatpush1.xpose.msra.mxu0 0.0
        %200 = vmatprep.subr.mxu0 0.0
        %201 = vmatpush1.xpose.msra.mxu0 0.0
        %202 = vmatprep.subr.mxu0 0.0
        %203 = vmatpush1.xpose.msra.mxu0 0.0
        %204 = vmatprep.subr.mxu0 0.0
        %205 = vmatpush1.xpose.msra.mxu0 0.0
        %206 = vmatprep.subr.mxu0 0.0
        %207 = vmatpush1.xpose.msra.mxu0 0.0
        %208 = vmatprep.subr.mxu0 0.0
        %209 = vmatpush1.xpose.msra.mxu0 0.0
        %210 = vmatprep.subr.mxu0 0.0
        %211 = vmatpush1.xpose.msra.mxu0 0.0
        %212 = vmatprep.subr.mxu0 0.0
        %213 = vmatpush1.xpose.msra.mxu0 %v180
        %214 = vmatprep.subr.mxu0 0.0
        %215 = vmatpush2.xpose.msra.mxu0 0.0
        %216 = vmatprep.subr.mxu0 0.0
        %217 = vmatpush2.xpose.msra.mxu0 0.0
        %218 = vmatprep.subr.mxu0 0.0
        %219 = vmatpush2.xpose.msra.mxu0 0.0
        %220 = vmatprep.subr.mxu0 0.0
        %221 = vmatpush2.xpose.msra.mxu0 0.0
        %222 = vmatprep.subr.mxu0 0.0
        %223 = vmatpush2.xpose.msra.mxu0 0.0
        %224 = vmatprep.subr.mxu0 0.0
        %225 = vmatpush2.xpose.msra.mxu0 0.0
        %226 = vmatprep.subr.mxu0 0.0
        %227 = vmatpush2.xpose.msra.mxu0 0.0
        %228 = vmatprep.subr.mxu0 0.0
        %229 = vmatpush2.xpose.msra.mxu0 0.0
        %230 = vmatprep.subr.mxu0 0.0
        %231 = vmatpush2.xpose.msra.mxu0 0.0
        %232 = vmatprep.subr.mxu0 0.0
        %233 = vmatpush2.xpose.msra.mxu0 0.0
        %234 = vmatprep.subr.mxu0 0.0
        %235 = vmatpush2.xpose.msra.mxu0 0.0
        %236 = vmatprep.subr.mxu0 0.0
        %237 = vmatpush2.xpose.msra.mxu0 0.0
        %238 = vmatprep.subr.mxu0 0.0
        %239 = vmatpush2.xpose.msra.mxu0 0.0
        %240 = vmatprep.subr.mxu0 0.0
        %241 = vmatpush2.xpose.msra.mxu0 0.0
        %242 = vmatprep.subr.mxu0 0.0
        %243 = vmatpush2.xpose.msra.mxu0 0.0
        %244 = vmatprep.subr.mxu0 0.0
        %245 = vmatpush2.xpose.msra.mxu0 0.0
        %246 = vmatprep.mubr.f32.mxu0 0.0
        %247 = vmatmul.mubr.f32.gmra.mxu0 %v177
        %v248 = vpop.f32.mrf.mxu0
        %v249 = vadd.f32 0.0, %v248
        %v250 = vpop.f32.mrf.mxu0
        %251 = vdwg.mxu0
        %s252 = scalar_lea.vmem %s172, %s24 [#allocation5]
        %vm253 = vcmask 57344
        %254 = vst.msk [vmem:[%s252] sm:$0x1] %vm253, %v249
        %p255 = scmp.eq.s32.totalorder %s24, 0
        // Predicated region
        $region33: #{tpu_custom_call.1} parent=27 // pred_check
          %p256 = pneg %p255
        $region34: #{tpu_custom_call.1} parent=27 // pred_check_branch
          %258 = sbr.rel (%p256) target = $region36
        $region35: #{tpu_custom_call.1} parent=27 // pred_region
          %v259 = vld [vmem:[%s172] sm:$0x1]
          %v260 = vsel %vm253, %v259, -inf
          %261 = vmax.xlane.f32.xlu0 %v260
          %v262 = vpop.xlane.xlu0 %261
          %v263 = vrot.slane %v262, 4
          %v264 = vmax.f32 %v262, %v263
          %v265 = vrot.slane %v264, 2
          %v266 = vmax.f32 %v264, %v265
          %v267 = vrot.slane %v266, 1
          %v268 = vmax.f32 %v266, %v267
          %s269 = vtos %v268
          %v270 = vstv %s269
          %v271 = vsub.f32 %v259, %v270
          %v272 = vmul.f32 %v271, 1.442695
          %v273 = vpow.pop %v272
          %v274 = vsel %vm253, %v273, 0.0
          %275 = vadd.xlane.f32.xlu0 %v274
          %v276 = vpop.xlane.xlu0 %275
          %v277 = vrot.slane %v276, 4
          %v278 = vadd.f32 %v276, %v277
          %v279 = vrot.slane %v278, 2
          %v280 = vadd.f32 %v278, %v279
          %v281 = vrot.slane %v280, 1
          %v282 = vadd.f32 %v280, %v281
          %s283 = vtos %v282
          %v284 = vstv %s283
          %v285 = vrcp.pop %v284
          %v286 = vmul.f32 %v273, %v285
          %287 = vst.msk [vmem:[%s172] sm:$0x1] %vm253, %v286
        $region36: #{tpu_custom_call.1} parent=27 // pred_fallthru
          _
        %s288 = sand.u32 %s88, 1
        %s289 = scalar_lea.sflag [#allocation4], %s288
        %s290 = sand.u32 %s88, 1
        %s291 = scalar_lea.vmem [#allocation5], %s290
        // Predicated region
        $region37: #{tpu_custom_call.1} parent=27 // pred_check
          %p292 = pneg %p98
        $region38: #{tpu_custom_call.1} parent=27 // pred_check_branch
          %294 = sbr.rel (%p292) target = $region40
        $region39: #{tpu_custom_call.1} parent=27 // pred_region
          %s296 = ssub.s32 16, 16
          %297 = vsyncadd %s289, %s296
          %s298 = smul.addr %s23, 16
          %s299 = scalar_lea.hbm %s2, %s298
          %s301 = sshll.u32 %s291, 4
          %s302 = int_to_ptr.vmem [resolvable:$true] %s301
          %304 = dma.vmem_to_hbm [thread:$0]  %s302, 16, %s299, %s289
        $region40: #{tpu_custom_call.1} parent=27 // pred_fallthru
          _
      $region28: #{tpu_custom_call.1} parent=5 // pred_fallthru
        _
      %p305 = scmp.le.s32.totalorder 2, %s14
      // Predicated region
      $region41: #{tpu_custom_call.1} parent=5 // pred_check
        %p306 = pneg %p305
      $region42: #{tpu_custom_call.1} parent=5 // pred_check_branch
        %308 = sbr.rel (%p306) target = $region44
      $region43: #{tpu_custom_call.1} parent=5 // pred_region
        %s309 = ssub.s32 %s14, 2
        // Predicated region
        $region45: #{tpu_custom_call.1} parent=43 // pred_check
          %p310 = pneg %p104
        $region46: #{tpu_custom_call.1} parent=43 // pred_check_branch
          %312 = sbr.rel (%p310) target = $region48
        $region47: #{tpu_custom_call.1} parent=43 // pred_region
          %s313 = sand.u32 %s89, 1
          %s314 = scalar_lea.sflag [#allocation4], %s313
          %s315 = sand.u32 %s89, 1
          %s316 = scalar_lea.vmem [#allocation5], %s315
          %317 = dma.done %s314, 16
        $region48: #{tpu_custom_call.1} parent=43 // pred_fallthru
          _
      $region44: #{tpu_custom_call.1} parent=5 // pred_fallthru
        _
    $region6: #{tpu_custom_call.1} parent=1 // loop_footer
      %s18 = sadd.s32 1, %s14
    $region7: #{tpu_custom_call.1} parent=1 // loop_footer_branch
      %13 = sbr.rel target = $region3
    $region8: #{tpu_custom_call.1} parent=1 // loop_exit
      _
    %318 = vsyncpa [#allocation3], 1
    %s319 = scalar_lea.sflag [#allocation3], 1
    %320 = vsyncpa %s319, 1
    %321 = vsyncpa [#allocation4], 1
    %s322 = scalar_lea.sflag [#allocation4], 1
    %323 = vsyncpa %s322, 1

</llo_original>
